<compile_context>
chip_gen: v7x
topology: tpu7x:2x2x1
jax: 0.10.0
libtpu: 0.0.40
codegen_flags: <defaults>
</compile_context>

<pallas_src>
import functools

import jax
import jax.numpy as jnp
from jax.experimental import pallas as pl
from jax.experimental.pallas import tpu as pltpu

_LANES = 128
_SUBLANES = 8
_CHUNK_ROWS = 1024        # in-kernel sub-chunk (512 KiB f32) bounding live ranges
_SMALL_N = 1 << 16        # below this, pure-JAX fast path beats kernel startup


def _cdiv(a, b):
    return -(-a // b)


def _device_kind():
    try:
        return jax.devices()[0].device_kind.lower()
    except Exception:
        return ""


def _default_block_rows():
    kind = _device_kind()
    # v6e/v7x: 32 MiB default scoped VMEM -> 8192-row (4 MiB f32) blocks safe
    # (2 inputs x 2 buffers x 4 MiB = 16 MiB). v5e / unknown: stay at 4096.
    if ("v6" in kind) or ("v7" in kind):
        return 8192
    return 4096


def _num_tensorcores():
    kind = _device_kind()
    # Chips whose single JAX device spans 2 TensorCores.
    if any(tag in kind for tag in ("v7", "v5p", "v4")):
        return 2
    return 1


def _huber_sum_f32(pred, targ, delta):
    """Pure-JAX Huber *sum* in f32 (fast path + ragged lane tails)."""
    e = jnp.abs(pred.astype(jnp.float32) - targ.astype(jnp.float32))
    q = jnp.minimum(e, jnp.float32(delta))
    return jnp.sum(q * (e - 0.5 * q))


def _huber_kernel(pred_ref, targ_ref, out_ref, *, delta, block_rows, chunk_rows,
                  num_chunks, blocks_per_split, valid_rows, needs_mask):
    # out_ref: (8, 128) f32 partial-sum slab, VMEM-resident across the
    # "arbitrary" reduction axis (same output block index for every i).
    c = pl.program_id(0)
    i = pl.program_id(1)

    @pl.when(i == 0)
    def _():
        out_ref[...] = jnp.zeros_like(out_ref)

    # Logical global row of this block's first row — used ONLY for masking the
    # ragged last block / phantom blocks, never for addressing.
    block_row0 = (c * blocks_per_split + i) * block_rows
    delta_f = jnp.float32(delta)

    def chunk_partial(j):
        r0 = j * chunk_rows
        if not isinstance(r0, int):
            r0 = pl.multiple_of(r0, chunk_rows)
        p = pred_ref[pl.ds(r0, chunk_rows), :].astype(jnp.float32)
        t = targ_ref[pl.ds(r0, chunk_rows), :].astype(jnp.float32)
        err = p - t
        if needs_mask:
            row_ids = (block_row0 + r0
                       + jax.lax.broadcasted_iota(jnp.int32, (chunk_rows, _LANES), 0))
            # Zero the error (a select, not a multiply) so NaN/Inf garbage in
            # the OOB region cannot contaminate the sum.
            err = jnp.where(row_ids < valid_rows, err, jnp.float32(0.0))
        abs_err = jnp.abs(err)
        q = jnp.minimum(abs_err, delta_f)            # torch.clamp(|e|, max=delta)
        loss = q * (abs_err - 0.5 * q)               # == 0.5*q^2 + delta*(|e|-q)
        # Reduce the sub-chunk to one (8,128) vreg: pure VPU adds; the reshape
        # is a layout no-op (trailing dims are exactly one (8,128) tile).
        return jnp.sum(loss.reshape(-1, _SUBLANES, _LANES), axis=0)

    if num_chunks == 1:
        out_ref[...] += chunk_partial(0)
    else:
        acc = jax.lax.fori_loop(
            0, num_chunks,
            lambda j, a: a + chunk_partial(j),
            jnp.zeros((_SUBLANES, _LANES), jnp.float32),
            unroll=(num_chunks <= 8))
        out_ref[...] += acc


def huber_loss(predictions, targets, delta=1.0, max_block_rows=None):
    """Pallas equivalent of HuberLoss.forward -> scalar mean loss (float32)."""
    assert predictions.shape == targets.shape
    n = predictions.size

    pred_flat = predictions.reshape(-1)
    targ_flat = targets.reshape(-1)

    # Tiny inputs: fixed pallas_call + DMA pipeline startup dominates -> let
    # XLA's fused elementwise+reduce handle it.
    if n < _SMALL_N:
        return _huber_sum_f32(pred_flat, targ_flat, delta) / jnp.float32(n)

    # Lane-aligned bulk goes through the kernel with no padded copy; the
    # (<128-element) lane tail is a tiny pure-JAX reduction.
    n_main = (n // _LANES) * _LANES
    if n_main < n:
        tail_sum = _huber_sum_f32(pred_flat[n_main:], targ_flat[n_main:], delta)
        pred_main = pred_flat[:n_main]
        targ_main = targ_flat[:n_main]
    else:
        tail_sum = jnp.float32(0.0)
        pred_main = pred_flat
        targ_main = targ_flat

    rows = n_main // _LANES
    pred2d = pred_main.reshape(rows, _LANES)   # free: contiguous flat -> row-major 2D
    targ2d = targ_main.reshape(rows, _LANES)

    # ---- Tiling -------------------------------------------------------------
    block_rows = max_block_rows if max_block_rows is not None else _default_block_rows()
    block_rows = max(_SUBLANES, (int(block_rows) // _SUBLANES) * _SUBLANES)
    rows_r8 = _cdiv(rows, _SUBLANES) * _SUBLANES
    block_rows = min(block_rows, rows_r8)
    if block_rows >= _CHUNK_ROWS:
        block_rows = (block_rows // _CHUNK_ROWS) * _CHUNK_ROWS
        chunk_rows = _CHUNK_ROWS
    else:
        chunk_rows = block_rows
    num_chunks = block_rows // chunk_rows

    num_blocks = _cdiv(rows, block_rows)

    # Split across TensorCores only on 2-TC-per-device chips with >= 2 blocks.
    cores = _num_tensorcores()
    num_splits = cores if (cores > 1 and num_blocks >= 2) else 1
    blocks_per_split = _cdiv(num_blocks, num_splits)

    grid_rows = num_splits * blocks_per_split * block_rows
    needs_mask = grid_rows != rows            # ragged last block and/or phantom block
    last_block = num_blocks - 1

    def _index_map(c, i):
        # Clamp phantom grid steps (odd num_blocks split over 2 cores) onto the
        # last real block; the in-kernel row mask zeroes their contribution.
        return (jnp.minimum(c * blocks_per_split + i, last_block), 0)

    kernel = functools.partial(
        _huber_kernel, delta=float(delta), block_rows=block_rows,
        chunk_rows=chunk_rows, num_chunks=num_chunks,
        blocks_per_split=blocks_per_split, valid_rows=rows,
        needs_mask=needs_mask)

    partials = pl.pallas_call(
        kernel,
        out_shape=jax.ShapeDtypeStruct((num_splits * _SUBLANES, _LANES), jnp.float32),
        grid_spec=pltpu.PrefetchScalarGridSpec(
            num_scalar_prefetch=0,
            grid=(num_splits, blocks_per_split),
            in_specs=[
                pl.BlockSpec((block_rows, _LANES), _index_map),
                pl.BlockSpec((block_rows, _LANES), _index_map),
            ],
            out_specs=pl.BlockSpec((_SUBLANES, _LANES), lambda c, i: (c, 0)),
        ),
        compiler_params=pltpu.CompilerParams(
            dimension_semantics=("parallel", "arbitrary"),
        ),
    )(pred2d, targ2d)

    # Single final cross-lane/sublane reduction + mean (tiny; left to XLA).
    return (jnp.sum(partials) + tail_sum) / jnp.float32(n)


def huber_loss_ref(predictions, targets, delta=1.0):
    err = predictions.astype(jnp.float32) - targets.astype(jnp.float32)
    abs_err = jnp.abs(err)
    quadratic = jnp.minimum(abs_err, delta)
    linear = abs_err - quadratic
    loss = 0.5 * quadratic ** 2 + delta * linear
    return jnp.mean(loss)


if __name__ == "__main__":
    key = jax.random.PRNGKey(0)
    delta = 1.0

    # (shape, dtype, max_block_rows override) — small shapes exercising:
    #   fast path, single (full / ragged) block, lane tail, multi-block +
    #   multi-chunk fori_loop, bf16 DMA path + odd block-rows rounding.
    cases = [
        ((64, 6),     jnp.float32, None),
        ((1024, 72),  jnp.float32, None),
        ((700, 100),  jnp.float32, None),
        ((9001, 9),   jnp.float32, None),
        ((25000, 16), jnp.float32, 2048),
        ((25000, 16), jnp.bfloat16, 520),
    ]

    for shape, dtype, mbr in cases:
        k1, k2, key = jax.random.split(key, 3)
        predictions = (jax.random.normal(k1, shape, dtype=jnp.float32) * 3.0).astype(dtype)
        targets = (jax.random.normal(k2, shape, dtype=jnp.float32) * 3.0).astype(dtype)

        out = huber_loss(predictions, targets, delta=delta, max_block_rows=mbr)
        out = jax.block_until_ready(out)
        ref = huber_loss_ref(predictions, targets, delta=delta)
        assert jnp.allclose(out, ref, rtol=2e-5, atol=2e-5), (shape, dtype, out, ref)

    print("KERNEL_OK")
</pallas_src>

<mosaic_0001>
module attributes {stable_mosaic.version = 11 : i64} {
  func.func @_huber_kernel(%arg0: i32, %arg1: i32, %arg2: memref<576x128xf32, #tpu.memory_space<vmem>>, %arg3: memref<576x128xf32, #tpu.memory_space<vmem>>, %arg4: memref<8x128xf32, #tpu.memory_space<vmem>>) attributes {dimension_semantics = [#tpu.dimension_semantics<parallel>, #tpu.dimension_semantics<arbitrary>], iteration_bounds = array<i64: 1, 1>, scalar_prefetch = 0 : i64, scratch_operands = 0 : i64, tpu.core_type = #tpu.core_type<tc>, window_params = [{transform_indices = @transform_0, window_bounds = array<i64: 576, 128>}, {transform_indices = @transform_1, window_bounds = array<i64: 576, 128>}, {transform_indices = @transform_2, window_bounds = array<i64: 8, 128>}]} {
    %c0_i32 = arith.constant 0 : i32
    %0 = arith.cmpi eq, %arg1, %c0_i32 : i32
    %1 = arith.extui %0 : i1 to i32
    %c0_i32_0 = arith.constant 0 : i32
    %2 = arith.cmpi ne, %1, %c0_i32_0 : i32
    scf.if %2 {
      %cst_10 = arith.constant 0.000000e+00 : f32
      %18 = vector.broadcast %cst_10 : f32 to vector<8x128xf32>
      %c0_11 = arith.constant 0 : index
      %c0_12 = arith.constant 0 : index
      %19 = vector.load %arg4[%c0_11, %c0_12] : memref<8x128xf32, #tpu.memory_space<vmem>>, vector<8x128xf32>
      tpu.vector_store %arg4[%c0_11, %c0_12], %18 {strides = array<i32>} : memref<8x128xf32, #tpu.memory_space<vmem>>, vector<8x128xf32>,
    } else {
    }
    %c0 = arith.constant 0 : index
    %c0_1 = arith.constant 0 : index
    %3 = vector.load %arg4[%c0, %c0_1] : memref<8x128xf32, #tpu.memory_space<vmem>>, vector<8x128xf32>
    %c0_2 = arith.constant 0 : index
    %c0_3 = arith.constant 0 : index
    %4 = vector.load %arg2[%c0_2, %c0_3] : memref<576x128xf32, #tpu.memory_space<vmem>>, vector<576x128xf32>
    %c0_4 = arith.constant 0 : index
    %c0_5 = arith.constant 0 : index
    %5 = vector.load %arg3[%c0_4, %c0_5] : memref<576x128xf32, #tpu.memory_space<vmem>>, vector<576x128xf32>
    %6 = arith.subf %4, %5 : vector<576x128xf32>
    %7 = math.absf %6 : vector<576x128xf32>
    %cst = arith.constant 1.000000e+00 : f32
    %8 = vector.broadcast %cst : f32 to vector<576x128xf32>
    %9 = arith.minimumf %7, %8 : vector<576x128xf32>
    %cst_6 = arith.constant 5.000000e-01 : f32
    %10 = vector.broadcast %cst_6 : f32 to vector<576x128xf32>
    %11 = arith.mulf %10, %9 : vector<576x128xf32>
    %12 = arith.subf %7, %11 : vector<576x128xf32>
    %13 = arith.mulf %9, %12 : vector<576x128xf32>
    %14 = vector.shape_cast %13 : vector<576x128xf32> to vector<72x8x128xf32>
    %cst_7 = arith.constant dense<0.000000e+00> : vector<8x128xf32>
    %15 = vector.multi_reduction <add>, %14, %cst_7 [0] : vector<72x8x128xf32> to vector<8x128xf32>
    %16 = arith.addf %3, %15 : vector<8x128xf32>
    %c0_8 = arith.constant 0 : index
    %c0_9 = arith.constant 0 : index
    %17 = vector.load %arg4[%c0_8, %c0_9] : memref<8x128xf32, #tpu.memory_space<vmem>>, vector<8x128xf32>
    tpu.vector_store %arg4[%c0_8, %c0_9], %16 {strides = array<i32>} : memref<8x128xf32, #tpu.memory_space<vmem>>, vector<8x128xf32>,
    return
  }
  func.func @transform_0(%arg0: i32, %arg1: i32) -> (i32, i32) {
    %c1_i32 = arith.constant 1 : i32
    %0 = arith.muli %arg0, %c1_i32 : i32
    %1 = arith.addi %0, %arg1 : i32
    %c0_i32 = arith.constant 0 : i32
    %2 = arith.minsi %1, %c0_i32 : i32
    %c0_i32_0 = arith.constant 0 : i32
    %c0_i32_1 = arith.constant 0 : i32
    return %2, %c0_i32_0 : i32, i32
  }
  func.func @transform_1(%arg0: i32, %arg1: i32) -> (i32, i32) {
    %c1_i32 = arith.constant 1 : i32
    %0 = arith.muli %arg0, %c1_i32 : i32
    %1 = arith.addi %0, %arg1 : i32
    %c0_i32 = arith.constant 0 : i32
    %2 = arith.minsi %1, %c0_i32 : i32
    %c0_i32_0 = arith.constant 0 : i32
    %c0_i32_1 = arith.constant 0 : i32
    return %2, %c0_i32_0 : i32, i32
  }
  func.func @transform_2(%arg0: i32, %arg1: i32) -> (i32, i32) {
    %c0_i32 = arith.constant 0 : i32
    %c0_i32_0 = arith.constant 0 : i32
    return %arg0, %c0_i32 : i32, i32
  }
}

</mosaic_0001>

<llo_original>
// kernel: tpu_custom_call.1
$region0: #{tpu_custom_call.1}
  #allocation0 [shape = 'u32[]', space=smem, size = 0x4, offset = 0x4, fixed_abs, tag = 'smem constant byte address 0x4 - core index']
  #allocation1 [shape = 'u32[144,128]{1,0:T(1,128)}', space=vmem, size = 0x12000, scoped, tag = 'internal scratch']
  %s0 = inlined_call_operand.hbm [shape: f32[576,128], index: 0, kind: input, shape index: {}]
  %s1 = inlined_call_operand.hbm [shape: f32[576,128], index: 1, kind: input, shape index: {}]
  %s2 = inlined_call_operand.hbm [shape: f32[8,128], index: 2, kind: output, shape index: {}]
  %s3 = sld [smem:[#allocation0]]
  $region30: #{tpu_custom_call.1} parent=0
    _
  %s5 = ssub.s32 1, %s3
  %s6 = scalar_select 0, %s5, %s3
  $region1: #{tpu_custom_call.1} parent=0
    #allocation2 [shape = 'u8[294912]{0}', space=vmem, size = 0x48000, scoped, tag = 'input window, operand 0, single buffered']
    #allocation3 [shape = 's32[1]{0}', space=sflag, size = 0x4, scoped, tag = 'scoped memory for tpu_custom_call.1']
    #allocation4 [shape = 's32[1]{0}', space=sflag, size = 0x4, scoped, tag = 'scoped memory for tpu_custom_call.1']
    #allocation5 [shape = 'u8[294912]{0}', space=vmem, size = 0x48000, scoped, tag = 'input window, operand 1, single buffered']
    #allocation6 [shape = 's32[1]{0}', space=sflag, size = 0x4, scoped, tag = 'scoped memory for tpu_custom_call.1']
    #allocation7 [shape = 'u8[4096]{0}', space=vmem, size = 0x1000, scoped, tag = 'output window, operand 0, single buffered']
    %7 = vsyncpa [#allocation3], 0
    %8 = vsyncpa [#allocation6], 0
    %9 = vsyncpa [#allocation4], 0
    // Predicated region
    $region2: #{tpu_custom_call.1} parent=1 // pred_check
      _
    $region3: #{tpu_custom_call.1} parent=1 // pred_check_branch
      %11 = sbr.rel (0) target = $region5
    $region4: #{tpu_custom_call.1} parent=1 // pred_region
      %s12 = sadd.s32 0, 0
      %p13 = scmp.lt.s32.totalorder %s12, 0
      %s14 = scalar_select %p13, %s12, 0
      %s15 = smul.u32 72, %s14
      %s17 = ssub.s32 9216, 9216
      %18 = vsyncadd [#allocation3], %s17
      %s19 = smul.addr %s15, 128
      %s20 = scalar_lea.hbm %s0, %s19
      %s21 = sshll.u32 [#allocation2], 4
      %s22 = int_to_ptr.vmem [resolvable:$true] %s21
      %27 = dma.hbm_to_vmem [thread:$0]  %s20, 9216, %s22, [#allocation3], 128, 128, 8
    $region5: #{tpu_custom_call.1} parent=1 // pred_fallthru
      _
    // Predicated region
    $region6: #{tpu_custom_call.1} parent=1 // pred_check
      _
    $region7: #{tpu_custom_call.1} parent=1 // pred_check_branch
      %29 = sbr.rel (0) target = $region9
    $region8: #{tpu_custom_call.1} parent=1 // pred_region
      %s30 = sadd.s32 0, 0
      %p31 = scmp.lt.s32.totalorder %s30, 0
      %s32 = scalar_select %p31, %s30, 0
      %s33 = smul.u32 72, %s32
      %s35 = ssub.s32 9216, 9216
      %36 = vsyncadd [#allocation6], %s35
      %s37 = smul.addr %s33, 128
      %s38 = scalar_lea.hbm %s1, %s37
      %s39 = sshll.u32 [#allocation5], 4
      %s40 = int_to_ptr.vmem [resolvable:$true] %s39
      %45 = dma.hbm_to_vmem [thread:$0]  %s38, 9216, %s40, [#allocation6], 128, 128, 8
    $region9: #{tpu_custom_call.1} parent=1 // pred_fallthru
      _
    // Predicated region
    $region10: #{tpu_custom_call.1} parent=1 // pred_check
      _
    $region11: #{tpu_custom_call.1} parent=1 // pred_check_branch
      %47 = sbr.rel (0) target = $region13
    $region12: #{tpu_custom_call.1} parent=1 // pred_region
      %48 = dma.done [#allocation3], 9216
    $region13: #{tpu_custom_call.1} parent=1 // pred_fallthru
      _
    // Predicated region
    $region14: #{tpu_custom_call.1} parent=1 // pred_check
      _
    $region15: #{tpu_custom_call.1} parent=1 // pred_check_branch
      %50 = sbr.rel (0) target = $region17
    $region16: #{tpu_custom_call.1} parent=1 // pred_region
      %51 = dma.done [#allocation6], 9216
    $region17: #{tpu_custom_call.1} parent=1 // pred_fallthru
      _
    %s52 = sadd.s32 0, 0
    %p53 = scmp.lt.s32.totalorder %s52, 0
    %s54 = scalar_select %p53, %s52, 0
    %s55 = smul.u32 72, %s54
    %s56 = sadd.s32 0, 0
    %p57 = scmp.lt.s32.totalorder %s56, 0
    %s58 = scalar_select %p57, %s56, 0
    %s59 = smul.u32 72, %s58
    %p60 = scmp.eq.s32.totalorder 0, 0
    // Predicated region
    $region18: #{tpu_custom_call.1} parent=1 // pred_check
      %p61 = pneg %p60
    $region19: #{tpu_custom_call.1} parent=1 // pred_check_branch
      %63 = sbr.rel (%p61) target = $region21
    $region20: #{tpu_custom_call.1} parent=1 // pred_region
      %64 = vst [vmem:[#allocation7] sm:$0xff] 0.0
    $region21: #{tpu_custom_call.1} parent=1 // pred_fallthru
      _
    %v65 = vld [vmem:[#allocation7] sm:$0xff]
    %v66 = vld [vmem:[#allocation2] sm:$0xff]
    %v67 = vld [vmem:[#allocation2 + $0x8] sm:$0xff]
    %v68 = vld [vmem:[#allocation2 + $0x10] sm:$0xff]
    %v69 = vld [vmem:[#allocation2 + $0x18] sm:$0xff]
    %v70 = vld [vmem:[#allocation2 + $0x20] sm:$0xff]
    %v71 = vld [vmem:[#allocation2 + $0x28] sm:$0xff]
    %v72 = vld [vmem:[#allocation2 + $0x30] sm:$0xff]
    %v73 = vld [vmem:[#allocation2 + $0x38] sm:$0xff]
    %v74 = vld [vmem:[#allocation2 + $0x40] sm:$0xff]
    %v75 = vld [vmem:[#allocation2 + $0x48] sm:$0xff]
    %v76 = vld [vmem:[#allocation2 + $0x50] sm:$0xff]
    %v77 = vld [vmem:[#allocation2 + $0x58] sm:$0xff]
    %v78 = vld [vmem:[#allocation2 + $0x60] sm:$0xff]
    %v79 = vld [vmem:[#allocation2 + $0x68] sm:$0xff]
    %v80 = vld [vmem:[#allocation2 + $0x70] sm:$0xff]
    %v81 = vld [vmem:[#allocation2 + $0x78] sm:$0xff]
    %v82 = vld [vmem:[#allocation2 + $0x80] sm:$0xff]
    %v83 = vld [vmem:[#allocation2 + $0x88] sm:$0xff]
    %v84 = vld [vmem:[#allocation2 + $0x90] sm:$0xff]
    %v85 = vld [vmem:[#allocation2 + $0x98] sm:$0xff]
    %v86 = vld [vmem:[#allocation2 + $0xa0] sm:$0xff]
    %v87 = vld [vmem:[#allocation2 + $0xa8] sm:$0xff]
    %v88 = vld [vmem:[#allocation2 + $0xb0] sm:$0xff]
    %v89 = vld [vmem:[#allocation2 + $0xb8] sm:$0xff]
    %v90 = vld [vmem:[#allocation2 + $0xc0] sm:$0xff]
    %v91 = vld [vmem:[#allocation2 + $0xc8] sm:$0xff]
    %v92 = vld [vmem:[#allocation2 + $0xd0] sm:$0xff]
    %v93 = vld [vmem:[#allocation2 + $0xd8] sm:$0xff]
    %v94 = vld [vmem:[#allocation2 + $0xe0] sm:$0xff]
    %v95 = vld [vmem:[#allocation2 + $0xe8] sm:$0xff]
    %v96 = vld [vmem:[#allocation2 + $0xf0] sm:$0xff]
    %v97 = vld [vmem:[#allocation2 + $0xf8] sm:$0xff]
    %v98 = vld [vmem:[#allocation2 + $0x100] sm:$0xff]
    %v99 = vld [vmem:[#allocation2 + $0x108] sm:$0xff]
    %v100 = vld [vmem:[#allocation2 + $0x110] sm:$0xff]
    %v101 = vld [vmem:[#allocation2 + $0x118] sm:$0xff]
    %v102 = vld [vmem:[#allocation2 + $0x120] sm:$0xff]
    %v103 = vld [vmem:[#allocation2 + $0x128] sm:$0xff]
    %v104 = vld [vmem:[#allocation2 + $0x130] sm:$0xff]
    %v105 = vld [vmem:[#allocation2 + $0x138] sm:$0xff]
    %v106 = vld [vmem:[#allocation2 + $0x140] sm:$0xff]
    %v107 = vld [vmem:[#allocation2 + $0x148] sm:$0xff]
    %v108 = vld [vmem:[#allocation2 + $0x150] sm:$0xff]
    %v109 = vld [vmem:[#allocation2 + $0x158] sm:$0xff]
    %v110 = vld [vmem:[#allocation2 + $0x160] sm:$0xff]
    %v111 = vld [vmem:[#allocation2 + $0x168] sm:$0xff]
    %v112 = vld [vmem:[#allocation2 + $0x170] sm:$0xff]
    %v113 = vld [vmem:[#allocation2 + $0x178] sm:$0xff]
    %v114 = vld [vmem:[#allocation2 + $0x180] sm:$0xff]
    %v115 = vld [vmem:[#allocation2 + $0x188] sm:$0xff]
    %v116 = vld [vmem:[#allocation2 + $0x190] sm:$0xff]
    %v117 = vld [vmem:[#allocation2 + $0x198] sm:$0xff]
    %v118 = vld [vmem:[#allocation2 + $0x1a0] sm:$0xff]
    %v119 = vld [vmem:[#allocation2 + $0x1a8] sm:$0xff]
    %v120 = vld [vmem:[#allocation2 + $0x1b0] sm:$0xff]
    %v121 = vld [vmem:[#allocation2 + $0x1b8] sm:$0xff]
    %v122 = vld [vmem:[#allocation2 + $0x1c0] sm:$0xff]
    %v123 = vld [vmem:[#allocation2 + $0x1c8] sm:$0xff]
    %v124 = vld [vmem:[#allocation2 + $0x1d0] sm:$0xff]
    %v125 = vld [vmem:[#allocation2 + $0x1d8] sm:$0xff]
    %v126 = vld [vmem:[#allocation2 + $0x1e0] sm:$0xff]
    %v127 = vld [vmem:[#allocation2 + $0x1e8] sm:$0xff]
    %v128 = vld [vmem:[#allocation2 + $0x1f0] sm:$0xff]
    %v129 = vld [vmem:[#allocation2 + $0x1f8] sm:$0xff]
    %v130 = vld [vmem:[#allocation2 + $0x200] sm:$0xff]
    %v131 = vld [vmem:[#allocation2 + $0x208] sm:$0xff]
    %v132 = vld [vmem:[#allocation2 + $0x210] sm:$0xff]
    %v133 = vld [vmem:[#allocation2 + $0x218] sm:$0xff]
    %v134 = vld [vmem:[#allocation2 + $0x220] sm:$0xff]
    %v135 = vld [vmem:[#allocation2 + $0x228] sm:$0xff]
    %v136 = vld [vmem:[#allocation2 + $0x230] sm:$0xff]
    %v137 = vld [vmem:[#allocation2 + $0x238] sm:$0xff]
    %v138 = vld [vmem:[#allocation5] sm:$0xff]
    %v139 = vld [vmem:[#allocation5 + $0x8] sm:$0xff]
    %v140 = vld [vmem:[#allocation5 + $0x10] sm:$0xff]
    %v141 = vld [vmem:[#allocation5 + $0x18] sm:$0xff]
    %v142 = vld [vmem:[#allocation5 + $0x20] sm:$0xff]
    %v143 = vld [vmem:[#allocation5 + $0x28] sm:$0xff]
    %v144 = vld [vmem:[#allocation5 + $0x30] sm:$0xff]
    %v145 = vld [vmem:[#allocation5 + $0x38] sm:$0xff]
    %v146 = vld [vmem:[#allocation5 + $0x40] sm:$0xff]
    %v147 = vld [vmem:[#allocation5 + $0x48] sm:$0xff]
    %v148 = vld [vmem:[#allocation5 + $0x50] sm:$0xff]
    %v149 = vld [vmem:[#allocation5 + $0x58] sm:$0xff]
    %v150 = vld [vmem:[#allocation5 + $0x60] sm:$0xff]
    %v151 = vld [vmem:[#allocation5 + $0x68] sm:$0xff]
    %v152 = vld [vmem:[#allocation5 + $0x70] sm:$0xff]
    %v153 = vld [vmem:[#allocation5 + $0x78] sm:$0xff]
    %v154 = vld [vmem:[#allocation5 + $0x80] sm:$0xff]
    %v155 = vld [vmem:[#allocation5 + $0x88] sm:$0xff]
    %v156 = vld [vmem:[#allocation5 + $0x90] sm:$0xff]
    %v157 = vld [vmem:[#allocation5 + $0x98] sm:$0xff]
    %v158 = vld [vmem:[#allocation5 + $0xa0] sm:$0xff]
    %v159 = vld [vmem:[#allocation5 + $0xa8] sm:$0xff]
    %v160 = vld [vmem:[#allocation5 + $0xb0] sm:$0xff]
    %v161 = vld [vmem:[#allocation5 + $0xb8] sm:$0xff]
    %v162 = vld [vmem:[#allocation5 + $0xc0] sm:$0xff]
    %v163 = vld [vmem:[#allocation5 + $0xc8] sm:$0xff]
    %v164 = vld [vmem:[#allocation5 + $0xd0] sm:$0xff]
    %v165 = vld [vmem:[#allocation5 + $0xd8] sm:$0xff]
    %v166 = vld [vmem:[#allocation5 + $0xe0] sm:$0xff]
    %v167 = vld [vmem:[#allocation5 + $0xe8] sm:$0xff]
    %v168 = vld [vmem:[#allocation5 + $0xf0] sm:$0xff]
    %v169 = vld [vmem:[#allocation5 + $0xf8] sm:$0xff]
    %v170 = vld [vmem:[#allocation5 + $0x100] sm:$0xff]
    %v171 = vld [vmem:[#allocation5 + $0x108] sm:$0xff]
    %v172 = vld [vmem:[#allocation5 + $0x110] sm:$0xff]
    %v173 = vld [vmem:[#allocation5 + $0x118] sm:$0xff]
    %v174 = vld [vmem:[#allocation5 + $0x120] sm:$0xff]
    %v175 = vld [vmem:[#allocation5 + $0x128] sm:$0xff]
    %v176 = vld [vmem:[#allocation5 + $0x130] sm:$0xff]
    %v177 = vld [vmem:[#allocation5 + $0x138] sm:$0xff]
    %v178 = vld [vmem:[#allocation5 + $0x140] sm:$0xff]
    %v179 = vld [vmem:[#allocation5 + $0x148] sm:$0xff]
    %v180 = vld [vmem:[#allocation5 + $0x150] sm:$0xff]
    %v181 = vld [vmem:[#allocation5 + $0x158] sm:$0xff]
    %v182 = vld [vmem:[#allocation5 + $0x160] sm:$0xff]
    %v183 = vld [vmem:[#allocation5 + $0x168] sm:$0xff]
    %v184 = vld [vmem:[#allocation5 + $0x170] sm:$0xff]
    %v185 = vld [vmem:[#allocation5 + $0x178] sm:$0xff]
    %v186 = vld [vmem:[#allocation5 + $0x180] sm:$0xff]
    %v187 = vld [vmem:[#allocation5 + $0x188] sm:$0xff]
    %v188 = vld [vmem:[#allocation5 + $0x190] sm:$0xff]
    %v189 = vld [vmem:[#allocation5 + $0x198] sm:$0xff]
    %v190 = vld [vmem:[#allocation5 + $0x1a0] sm:$0xff]
    %v191 = vld [vmem:[#allocation5 + $0x1a8] sm:$0xff]
    %v192 = vld [vmem:[#allocation5 + $0x1b0] sm:$0xff]
    %v193 = vld [vmem:[#allocation5 + $0x1b8] sm:$0xff]
    %v194 = vld [vmem:[#allocation5 + $0x1c0] sm:$0xff]
    %v195 = vld [vmem:[#allocation5 + $0x1c8] sm:$0xff]
    %v196 = vld [vmem:[#allocation5 + $0x1d0] sm:$0xff]
    %v197 = vld [vmem:[#allocation5 + $0x1d8] sm:$0xff]
    %v198 = vld [vmem:[#allocation5 + $0x1e0] sm:$0xff]
    %v199 = vld [vmem:[#allocation5 + $0x1e8] sm:$0xff]
    %v200 = vld [vmem:[#allocation5 + $0x1f0] sm:$0xff]
    %v201 = vld [vmem:[#allocation5 + $0x1f8] sm:$0xff]
    %v202 = vld [vmem:[#allocation5 + $0x200] sm:$0xff]
    %v203 = vld [vmem:[#allocation5 + $0x208] sm:$0xff]
    %v204 = vld [vmem:[#allocation5 + $0x210] sm:$0xff]
    %v205 = vld [vmem:[#allocation5 + $0x218] sm:$0xff]
    %v206 = vld [vmem:[#allocation5 + $0x220] sm:$0xff]
    %v207 = vld [vmem:[#allocation5 + $0x228] sm:$0xff]
    %v208 = vld [vmem:[#allocation5 + $0x230] sm:$0xff]
    %v209 = vld [vmem:[#allocation5 + $0x238] sm:$0xff]
    %v210 = vsub.f32 %v66, %v138
    %v211 = vsub.f32 %v67, %v139
    %v212 = vsub.f32 %v68, %v140
    %v213 = vsub.f32 %v69, %v141
    %v214 = vsub.f32 %v70, %v142
    %v215 = vsub.f32 %v71, %v143
    %v216 = vsub.f32 %v72, %v144
    %v217 = vsub.f32 %v73, %v145
    %v218 = vsub.f32 %v74, %v146
    %v219 = vsub.f32 %v75, %v147
    %v220 = vsub.f32 %v76, %v148
    %v221 = vsub.f32 %v77, %v149
    %v222 = vsub.f32 %v78, %v150
    %v223 = vsub.f32 %v79, %v151
    %v224 = vsub.f32 %v80, %v152
    %v225 = vsub.f32 %v81, %v153
    %v226 = vsub.f32 %v82, %v154
    %v227 = vsub.f32 %v83, %v155
    %v228 = vsub.f32 %v84, %v156
    %v229 = vsub.f32 %v85, %v157
    %v230 = vsub.f32 %v86, %v158
    %v231 = vsub.f32 %v87, %v159
    %v232 = vsub.f32 %v88, %v160
    %v233 = vsub.f32 %v89, %v161
    %v234 = vsub.f32 %v90, %v162
    %v235 = vsub.f32 %v91, %v163
    %v236 = vsub.f32 %v92, %v164
    %v237 = vsub.f32 %v93, %v165
    %v238 = vsub.f32 %v94, %v166
    %v239 = vsub.f32 %v95, %v167
    %v240 = vsub.f32 %v96, %v168
    %v241 = vsub.f32 %v97, %v169
    %v242 = vsub.f32 %v98, %v170
    %v243 = vsub.f32 %v99, %v171
    %v244 = vsub.f32 %v100, %v172
    %v245 = vsub.f32 %v101, %v173
    %v246 = vsub.f32 %v102, %v174
    %v247 = vsub.f32 %v103, %v175
    %v248 = vsub.f32 %v104, %v176
    %v249 = vsub.f32 %v105, %v177
    %v250 = vsub.f32 %v106, %v178
    %v251 = vsub.f32 %v107, %v179
    %v252 = vsub.f32 %v108, %v180
    %v253 = vsub.f32 %v109, %v181
    %v254 = vsub.f32 %v110, %v182
    %v255 = vsub.f32 %v111, %v183
    %v256 = vsub.f32 %v112, %v184
    %v257 = vsub.f32 %v113, %v185
    %v258 = vsub.f32 %v114, %v186
    %v259 = vsub.f32 %v115, %v187
    %v260 = vsub.f32 %v116, %v188
    %v261 = vsub.f32 %v117, %v189
    %v262 = vsub.f32 %v118, %v190
    %v263 = vsub.f32 %v119, %v191
    %v264 = vsub.f32 %v120, %v192
    %v265 = vsub.f32 %v121, %v193
    %v266 = vsub.f32 %v122, %v194
    %v267 = vsub.f32 %v123, %v195
    %v268 = vsub.f32 %v124, %v196
    %v269 = vsub.f32 %v125, %v197
    %v270 = vsub.f32 %v126, %v198
    %v271 = vsub.f32 %v127, %v199
    %v272 = vsub.f32 %v128, %v200
    %v273 = vsub.f32 %v129, %v201
    %v274 = vsub.f32 %v130, %v202
    %v275 = vsub.f32 %v131, %v203
    %v276 = vsub.f32 %v132, %v204
    %v277 = vsub.f32 %v133, %v205
    %v278 = vsub.f32 %v134, %v206
    %v279 = vsub.f32 %v135, %v207
    %v280 = vsub.f32 %v136, %v208
    %v281 = vsub.f32 %v137, %v209
    %v282 = vand.u32 2147483647, %v210
    %v283 = vand.u32 2147483647, %v211
    %v284 = vand.u32 2147483647, %v212
    %v285 = vand.u32 2147483647, %v213
    %v286 = vand.u32 2147483647, %v214
    %v287 = vand.u32 2147483647, %v215
    %v288 = vand.u32 2147483647, %v216
    %v289 = vand.u32 2147483647, %v217
    %v290 = vand.u32 2147483647, %v218
    %v291 = vand.u32 2147483647, %v219
    %v292 = vand.u32 2147483647, %v220
    %v293 = vand.u32 2147483647, %v221
    %v294 = vand.u32 2147483647, %v222
    %v295 = vand.u32 2147483647, %v223
    %v296 = vand.u32 2147483647, %v224
    %v297 = vand.u32 2147483647, %v225
    %v298 = vand.u32 2147483647, %v226
    %v299 = vand.u32 2147483647, %v227
    %v300 = vand.u32 2147483647, %v228
    %v301 = vand.u32 2147483647, %v229
    %v302 = vand.u32 2147483647, %v230
    %v303 = vand.u32 2147483647, %v231
    %v304 = vand.u32 2147483647, %v232
    %v305 = vand.u32 2147483647, %v233
    %v306 = vand.u32 2147483647, %v234
    %v307 = vand.u32 2147483647, %v235
    %v308 = vand.u32 2147483647, %v236
    %v309 = vand.u32 2147483647, %v237
    %v310 = vand.u32 2147483647, %v238
    %v311 = vand.u32 2147483647, %v239
    %v312 = vand.u32 2147483647, %v240
    %v313 = vand.u32 2147483647, %v241
    %v314 = vand.u32 2147483647, %v242
    %v315 = vand.u32 2147483647, %v243
    %v316 = vand.u32 2147483647, %v244
    %v317 = vand.u32 2147483647, %v245
    %v318 = vand.u32 2147483647, %v246
    %v319 = vand.u32 2147483647, %v247
    %v320 = vand.u32 2147483647, %v248
    %v321 = vand.u32 2147483647, %v249
    %v322 = vand.u32 2147483647, %v250
    %v323 = vand.u32 2147483647, %v251
    %v324 = vand.u32 2147483647, %v252
    %v325 = vand.u32 2147483647, %v253
    %v326 = vand.u32 2147483647, %v254
    %v327 = vand.u32 2147483647, %v255
    %v328 = vand.u32 2147483647, %v256
    %v329 = vand.u32 2147483647, %v257
    %v330 = vand.u32 2147483647, %v258
    %v331 = vand.u32 2147483647, %v259
    %v332 = vand.u32 2147483647, %v260
    %v333 = vand.u32 2147483647, %v261
    %v334 = vand.u32 2147483647, %v262
    %v335 = vand.u32 2147483647, %v263
    %v336 = vand.u32 2147483647, %v264
    %v337 = vand.u32 2147483647, %v265
    %v338 = vand.u32 2147483647, %v266
    %v339 = vand.u32 2147483647, %v267
    %v340 = vand.u32 2147483647, %v268
    %v341 = vand.u32 2147483647, %v269
    %v342 = vand.u32 2147483647, %v270
    %v343 = vand.u32 2147483647, %v271
    %v344 = vand.u32 2147483647, %v272
    %v345 = vand.u32 2147483647, %v273
    %v346 = vand.u32 2147483647, %v274
    %v347 = vand.u32 2147483647, %v275
    %v348 = vand.u32 2147483647, %v276
    %v349 = vand.u32 2147483647, %v277
    %v350 = vand.u32 2147483647, %v278
    %v351 = vand.u32 2147483647, %v279
    %v352 = vand.u32 2147483647, %v280
    %v353 = vand.u32 2147483647, %v281
    %v354 = vmin.f32 %v282, 1.0
    %v355 = vmin.f32 %v283, 1.0
    %v356 = vmin.f32 %v284, 1.0
    %v357 = vmin.f32 %v285, 1.0
    %v358 = vmin.f32 %v286, 1.0
    %v359 = vmin.f32 %v287, 1.0
    %v360 = vmin.f32 %v288, 1.0
    %v361 = vmin.f32 %v289, 1.0
    %v362 = vmin.f32 %v290, 1.0
    %v363 = vmin.f32 %v291, 1.0
    %v364 = vmin.f32 %v292, 1.0
    %v365 = vmin.f32 %v293, 1.0
    %v366 = vmin.f32 %v294, 1.0
    %v367 = vmin.f32 %v295, 1.0
    %v368 = vmin.f32 %v296, 1.0
    %v369 = vmin.f32 %v297, 1.0
    %v370 = vmin.f32 %v298, 1.0
    %v371 = vmin.f32 %v299, 1.0
    %v372 = vmin.f32 %v300, 1.0
    %v373 = vmin.f32 %v301, 1.0
    %v374 = vmin.f32 %v302, 1.0
    %v375 = vmin.f32 %v303, 1.0
    %v376 = vmin.f32 %v304, 1.0
    %v377 = vmin.f32 %v305, 1.0
    %v378 = vmin.f32 %v306, 1.0
    %v379 = vmin.f32 %v307, 1.0
    %v380 = vmin.f32 %v308, 1.0
    %v381 = vmin.f32 %v309, 1.0
    %v382 = vmin.f32 %v310, 1.0
    %v383 = vmin.f32 %v311, 1.0
    %v384 = vmin.f32 %v312, 1.0
    %v385 = vmin.f32 %v313, 1.0
    %v386 = vmin.f32 %v314, 1.0
    %v387 = vmin.f32 %v315, 1.0
    %v388 = vmin.f32 %v316, 1.0
    %v389 = vmin.f32 %v317, 1.0
    %v390 = vmin.f32 %v318, 1.0
    %v391 = vmin.f32 %v319, 1.0
    %v392 = vmin.f32 %v320, 1.0
    %v393 = vmin.f32 %v321, 1.0
    %v394 = vmin.f32 %v322, 1.0
    %v395 = vmin.f32 %v323, 1.0
    %v396 = vmin.f32 %v324, 1.0
    %v397 = vmin.f32 %v325, 1.0
    %v398 = vmin.f32 %v326, 1.0
    %v399 = vmin.f32 %v327, 1.0
    %v400 = vmin.f32 %v328, 1.0
    %v401 = vmin.f32 %v329, 1.0
    %v402 = vmin.f32 %v330, 1.0
    %v403 = vmin.f32 %v331, 1.0
    %v404 = vmin.f32 %v332, 1.0
    %v405 = vmin.f32 %v333, 1.0
    %v406 = vmin.f32 %v334, 1.0
    %v407 = vmin.f32 %v335, 1.0
    %v408 = vmin.f32 %v336, 1.0
    %v409 = vmin.f32 %v337, 1.0
    %v410 = vmin.f32 %v338, 1.0
    %v411 = vmin.f32 %v339, 1.0
    %v412 = vmin.f32 %v340, 1.0
    %v413 = vmin.f32 %v341, 1.0
    %v414 = vmin.f32 %v342, 1.0
    %v415 = vmin.f32 %v343, 1.0
    %v416 = vmin.f32 %v344, 1.0
    %v417 = vmin.f32 %v345, 1.0
    %v418 = vmin.f32 %v346, 1.0
    %v419 = vmin.f32 %v347, 1.0
    %v420 = vmin.f32 %v348, 1.0
    %v421 = vmin.f32 %v349, 1.0
    %v422 = vmin.f32 %v350, 1.0
    %v423 = vmin.f32 %v351, 1.0
    %v424 = vmin.f32 %v352, 1.0
    %v425 = vmin.f32 %v353, 1.0
    %v426 = vmul.f32 %v354, 0.5
    %v427 = vmul.f32 %v355, 0.5
    %v428 = vmul.f32 %v356, 0.5
    %v429 = vmul.f32 %v357, 0.5
    %v430 = vmul.f32 %v358, 0.5
    %v431 = vmul.f32 %v359, 0.5
    %v432 = vmul.f32 %v360, 0.5
    %v433 = vmul.f32 %v361, 0.5
    %v434 = vmul.f32 %v362, 0.5
    %v435 = vmul.f32 %v363, 0.5
    %v436 = vmul.f32 %v364, 0.5
    %v437 = vmul.f32 %v365, 0.5
    %v438 = vmul.f32 %v366, 0.5
    %v439 = vmul.f32 %v367, 0.5
    %v440 = vmul.f32 %v368, 0.5
    %v441 = vmul.f32 %v369, 0.5
    %v442 = vmul.f32 %v370, 0.5
    %v443 = vmul.f32 %v371, 0.5
    %v444 = vmul.f32 %v372, 0.5
    %v445 = vmul.f32 %v373, 0.5
    %v446 = vmul.f32 %v374, 0.5
    %v447 = vmul.f32 %v375, 0.5
    %v448 = vmul.f32 %v376, 0.5
    %v449 = vmul.f32 %v377, 0.5
    %v450 = vmul.f32 %v378, 0.5
    %v451 = vmul.f32 %v379, 0.5
    %v452 = vmul.f32 %v380, 0.5
    %v453 = vmul.f32 %v381, 0.5
    %v454 = vmul.f32 %v382, 0.5
    %v455 = vmul.f32 %v383, 0.5
    %v456 = vmul.f32 %v384, 0.5
    %v457 = vmul.f32 %v385, 0.5
    %v458 = vmul.f32 %v386, 0.5
    %v459 = vmul.f32 %v387, 0.5
    %v460 = vmul.f32 %v388, 0.5
    %v461 = vmul.f32 %v389, 0.5
    %v462 = vmul.f32 %v390, 0.5
    %v463 = vmul.f32 %v391, 0.5
    %v464 = vmul.f32 %v392, 0.5
    %v465 = vmul.f32 %v393, 0.5
    %v466 = vmul.f32 %v394, 0.5
    %v467 = vmul.f32 %v395, 0.5
    %v468 = vmul.f32 %v396, 0.5
    %v469 = vmul.f32 %v397, 0.5
    %v470 = vmul.f32 %v398, 0.5
    %v471 = vmul.f32 %v399, 0.5
    %v472 = vmul.f32 %v400, 0.5
    %v473 = vmul.f32 %v401, 0.5
    %v474 = vmul.f32 %v402, 0.5
    %v475 = vmul.f32 %v403, 0.5
    %v476 = vmul.f32 %v404, 0.5
    %v477 = vmul.f32 %v405, 0.5
    %v478 = vmul.f32 %v406, 0.5
    %v479 = vmul.f32 %v407, 0.5
    %v480 = vmul.f32 %v408, 0.5
    %v481 = vmul.f32 %v409, 0.5
    %v482 = vmul.f32 %v410, 0.5
    %v483 = vmul.f32 %v411, 0.5
    %v484 = vmul.f32 %v412, 0.5
    %v485 = vmul.f32 %v413, 0.5
    %v486 = vmul.f32 %v414, 0.5
    %v487 = vmul.f32 %v415, 0.5
    %v488 = vmul.f32 %v416, 0.5
    %v489 = vmul.f32 %v417, 0.5
    %v490 = vmul.f32 %v418, 0.5
    %v491 = vmul.f32 %v419, 0.5
    %v492 = vmul.f32 %v420, 0.5
    %v493 = vmul.f32 %v421, 0.5
    %v494 = vmul.f32 %v422, 0.5
    %v495 = vmul.f32 %v423, 0.5
    %v496 = vmul.f32 %v424, 0.5
    %v497 = vmul.f32 %v425, 0.5
    %v498 = vsub.f32 %v282, %v426
    %v499 = vsub.f32 %v283, %v427
    %v500 = vsub.f32 %v284, %v428
    %v501 = vsub.f32 %v285, %v429
    %v502 = vsub.f32 %v286, %v430
    %v503 = vsub.f32 %v287, %v431
    %v504 = vsub.f32 %v288, %v432
    %v505 = vsub.f32 %v289, %v433
    %v506 = vsub.f32 %v290, %v434
    %v507 = vsub.f32 %v291, %v435
    %v508 = vsub.f32 %v292, %v436
    %v509 = vsub.f32 %v293, %v437
    %v510 = vsub.f32 %v294, %v438
    %v511 = vsub.f32 %v295, %v439
    %v512 = vsub.f32 %v296, %v440
    %v513 = vsub.f32 %v297, %v441
    %v514 = vsub.f32 %v298, %v442
    %v515 = vsub.f32 %v299, %v443
    %v516 = vsub.f32 %v300, %v444
    %v517 = vsub.f32 %v301, %v445
    %v518 = vsub.f32 %v302, %v446
    %v519 = vsub.f32 %v303, %v447
    %v520 = vsub.f32 %v304, %v448
    %v521 = vsub.f32 %v305, %v449
    %v522 = vsub.f32 %v306, %v450
    %v523 = vsub.f32 %v307, %v451
    %v524 = vsub.f32 %v308, %v452
    %v525 = vsub.f32 %v309, %v453
    %v526 = vsub.f32 %v310, %v454
    %v527 = vsub.f32 %v311, %v455
    %v528 = vsub.f32 %v312, %v456
    %v529 = vsub.f32 %v313, %v457
    %v530 = vsub.f32 %v314, %v458
    %v531 = vsub.f32 %v315, %v459
    %v532 = vsub.f32 %v316, %v460
    %v533 = vsub.f32 %v317, %v461
    %v534 = vsub.f32 %v318, %v462
    %v535 = vsub.f32 %v319, %v463
    %v536 = vsub.f32 %v320, %v464
    %v537 = vsub.f32 %v321, %v465
    %v538 = vsub.f32 %v322, %v466
    %v539 = vsub.f32 %v323, %v467
    %v540 = vsub.f32 %v324, %v468
    %v541 = vsub.f32 %v325, %v469
    %v542 = vsub.f32 %v326, %v470
    %v543 = vsub.f32 %v327, %v471
    %v544 = vsub.f32 %v328, %v472
    %v545 = vsub.f32 %v329, %v473
    %v546 = vsub.f32 %v330, %v474
    %v547 = vsub.f32 %v331, %v475
    %v548 = vsub.f32 %v332, %v476
    %v549 = vsub.f32 %v333, %v477
    %v550 = vsub.f32 %v334, %v478
    %v551 = vsub.f32 %v335, %v479
    %v552 = vsub.f32 %v336, %v480
    %v553 = vsub.f32 %v337, %v481
    %v554 = vsub.f32 %v338, %v482
    %v555 = vsub.f32 %v339, %v483
    %v556 = vsub.f32 %v340, %v484
    %v557 = vsub.f32 %v341, %v485
    %v558 = vsub.f32 %v342, %v486
    %v559 = vsub.f32 %v343, %v487
    %v560 = vsub.f32 %v344, %v488
    %v561 = vsub.f32 %v345, %v489
    %v562 = vsub.f32 %v346, %v490
    %v563 = vsub.f32 %v347, %v491
    %v564 = vsub.f32 %v348, %v492
    %v565 = vsub.f32 %v349, %v493
    %v566 = vsub.f32 %v350, %v494
    %v567 = vsub.f32 %v351, %v495
    %v568 = vsub.f32 %v352, %v496
    %v569 = vsub.f32 %v353, %v497
    %v570 = vmul.f32 %v354, %v498
    %v571 = vmul.f32 %v355, %v499
    %v572 = vmul.f32 %v356, %v500
    %v573 = vmul.f32 %v357, %v501
    %v574 = vmul.f32 %v358, %v502
    %v575 = vmul.f32 %v359, %v503
    %v576 = vmul.f32 %v360, %v504
    %v577 = vmul.f32 %v361, %v505
    %v578 = vmul.f32 %v362, %v506
    %v579 = vmul.f32 %v363, %v507
    %v580 = vmul.f32 %v364, %v508
    %v581 = vmul.f32 %v365, %v509
    %v582 = vmul.f32 %v366, %v510
    %v583 = vmul.f32 %v367, %v511
    %v584 = vmul.f32 %v368, %v512
    %v585 = vmul.f32 %v369, %v513
    %v586 = vmul.f32 %v370, %v514
    %v587 = vmul.f32 %v371, %v515
    %v588 = vmul.f32 %v372, %v516
    %v589 = vmul.f32 %v373, %v517
    %v590 = vmul.f32 %v374, %v518
    %v591 = vmul.f32 %v375, %v519
    %v592 = vmul.f32 %v376, %v520
    %v593 = vmul.f32 %v377, %v521
    %v594 = vmul.f32 %v378, %v522
    %v595 = vmul.f32 %v379, %v523
    %v596 = vmul.f32 %v380, %v524
    %v597 = vmul.f32 %v381, %v525
    %v598 = vmul.f32 %v382, %v526
    %v599 = vmul.f32 %v383, %v527
    %v600 = vmul.f32 %v384, %v528
    %v601 = vmul.f32 %v385, %v529
    %v602 = vmul.f32 %v386, %v530
    %v603 = vmul.f32 %v387, %v531
    %v604 = vmul.f32 %v388, %v532
    %v605 = vmul.f32 %v389, %v533
    %v606 = vmul.f32 %v390, %v534
    %v607 = vmul.f32 %v391, %v535
    %v608 = vmul.f32 %v392, %v536
    %v609 = vmul.f32 %v393, %v537
    %v610 = vmul.f32 %v394, %v538
    %v611 = vmul.f32 %v395, %v539
    %v612 = vmul.f32 %v396, %v540
    %v613 = vmul.f32 %v397, %v541
    %v614 = vmul.f32 %v398, %v542
    %v615 = vmul.f32 %v399, %v543
    %v616 = vmul.f32 %v400, %v544
    %v617 = vmul.f32 %v401, %v545
    %v618 = vmul.f32 %v402, %v546
    %v619 = vmul.f32 %v403, %v547
    %v620 = vmul.f32 %v404, %v548
    %v621 = vmul.f32 %v405, %v549
    %v622 = vmul.f32 %v406, %v550
    %v623 = vmul.f32 %v407, %v551
    %v624 = vmul.f32 %v408, %v552
    %v625 = vmul.f32 %v409, %v553
    %v626 = vmul.f32 %v410, %v554
    %v627 = vmul.f32 %v411, %v555
    %v628 = vmul.f32 %v412, %v556
    %v629 = vmul.f32 %v413, %v557
    %v630 = vmul.f32 %v414, %v558
    %v631 = vmul.f32 %v415, %v559
    %v632 = vmul.f32 %v416, %v560
    %v633 = vmul.f32 %v417, %v561
    %v634 = vmul.f32 %v418, %v562
    %v635 = vmul.f32 %v419, %v563
    %v636 = vmul.f32 %v420, %v564
    %v637 = vmul.f32 %v421, %v565
    %v638 = vmul.f32 %v422, %v566
    %v639 = vmul.f32 %v423, %v567
    %v640 = vmul.f32 %v424, %v568
    %v641 = vmul.f32 %v425, %v569
    %v642 = vadd.f32 %v570, %v571
    %v643 = vadd.f32 %v642, %v572
    %v644 = vadd.f32 %v643, %v573
    %v645 = vadd.f32 %v644, %v574
    %v646 = vadd.f32 %v645, %v575
    %v647 = vadd.f32 %v646, %v576
    %v648 = vadd.f32 %v647, %v577
    %v649 = vadd.f32 %v648, %v578
    %v650 = vadd.f32 %v649, %v579
    %v651 = vadd.f32 %v650, %v580
    %v652 = vadd.f32 %v651, %v581
    %v653 = vadd.f32 %v652, %v582
    %v654 = vadd.f32 %v653, %v583
    %v655 = vadd.f32 %v654, %v584
    %v656 = vadd.f32 %v655, %v585
    %v657 = vadd.f32 %v656, %v586
    %v658 = vadd.f32 %v657, %v587
    %v659 = vadd.f32 %v658, %v588
    %v660 = vadd.f32 %v659, %v589
    %v661 = vadd.f32 %v660, %v590
    %v662 = vadd.f32 %v661, %v591
    %v663 = vadd.f32 %v662, %v592
    %v664 = vadd.f32 %v663, %v593
    %v665 = vadd.f32 %v664, %v594
    %v666 = vadd.f32 %v665, %v595
    %v667 = vadd.f32 %v666, %v596
    %v668 = vadd.f32 %v667, %v597
    %v669 = vadd.f32 %v668, %v598
    %v670 = vadd.f32 %v669, %v599
    %v671 = vadd.f32 %v670, %v600
    %v672 = vadd.f32 %v671, %v601
    %v673 = vadd.f32 %v672, %v602
    %v674 = vadd.f32 %v673, %v603
    %v675 = vadd.f32 %v674, %v604
    %v676 = vadd.f32 %v675, %v605
    %v677 = vadd.f32 %v676, %v606
    %v678 = vadd.f32 %v677, %v607
    %v679 = vadd.f32 %v678, %v608
    %v680 = vadd.f32 %v679, %v609
    %v681 = vadd.f32 %v680, %v610
    %v682 = vadd.f32 %v681, %v611
    %v683 = vadd.f32 %v682, %v612
    %v684 = vadd.f32 %v683, %v613
    %v685 = vadd.f32 %v684, %v614
    %v686 = vadd.f32 %v685, %v615
    %v687 = vadd.f32 %v686, %v616
    %v688 = vadd.f32 %v687, %v617
    %v689 = vadd.f32 %v688, %v618
    %v690 = vadd.f32 %v689, %v619
    %v691 = vadd.f32 %v690, %v620
    %v692 = vadd.f32 %v691, %v621
    %v693 = vadd.f32 %v692, %v622
    %v694 = vadd.f32 %v693, %v623
    %v695 = vadd.f32 %v694, %v624
    %v696 = vadd.f32 %v695, %v625
    %v697 = vadd.f32 %v696, %v626
    %v698 = vadd.f32 %v697, %v627
    %v699 = vadd.f32 %v698, %v628
    %v700 = vadd.f32 %v699, %v629
    %v701 = vadd.f32 %v700, %v630
    %v702 = vadd.f32 %v701, %v631
    %v703 = vadd.f32 %v702, %v632
    %v704 = vadd.f32 %v703, %v633
    %v705 = vadd.f32 %v704, %v634
    %v706 = vadd.f32 %v705, %v635
    %v707 = vadd.f32 %v706, %v636
    %v708 = vadd.f32 %v707, %v637
    %v709 = vadd.f32 %v708, %v638
    %v710 = vadd.f32 %v709, %v639
    %v711 = vadd.f32 %v710, %v640
    %v712 = vadd.f32 %v711, %v641
    %v713 = vadd.f32 %v65, %v712
    %714 = vst [vmem:[#allocation7] sm:$0xff] %v713
    // Predicated region
    $region22: #{tpu_custom_call.1} parent=1 // pred_check
      _
    $region23: #{tpu_custom_call.1} parent=1 // pred_check_branch
      %716 = sbr.rel (0) target = $region25
    $region24: #{tpu_custom_call.1} parent=1 // pred_region
      %s718 = ssub.s32 128, 128
      %719 = vsyncadd [#allocation4], %s718
      %s721 = sshll.u32 [#allocation7], 4
      %s722 = int_to_ptr.vmem [resolvable:$true] %s721
      %724 = dma.vmem_to_hbm [thread:$0]  %s722, 128, %s2, [#allocation4]
    $region25: #{tpu_custom_call.1} parent=1 // pred_fallthru
      _
    // Predicated region
    $region26: #{tpu_custom_call.1} parent=1 // pred_check
      _
    $region27: #{tpu_custom_call.1} parent=1 // pred_check_branch
      %726 = sbr.rel (0) target = $region29
    $region28: #{tpu_custom_call.1} parent=1 // pred_region
      %727 = dma.done [#allocation4], 128
    $region29: #{tpu_custom_call.1} parent=1 // pred_fallthru
      _
    %728 = vsyncpa [#allocation3], 1
    %729 = vsyncpa [#allocation6], 1
    %730 = vsyncpa [#allocation4], 1

</llo_original>
